<compile_context>
chip_gen: v7x
topology: tpu7x:2x2x1
jax: 0.10.0
libtpu: 0.0.40
codegen_flags: <defaults>
</compile_context>

<pallas_src>
import jax
import jax.numpy as jnp
from jax.experimental import pallas as pl
from jax.experimental.pallas import tpu as pltpu

IN_DIM = 38
H1_DIM, H2_DIM, OUT_DIM = 100, 200, 100          # logical (PyTorch) widths
H1_PAD, H2_PAD = 128, 256                        # lane-dense padded hidden widths
OUT_PAD = 128                                    # padded width of W3 columns


def _round_up(n, m):
    return ((n + m - 1) // m) * m


def _mlp_kernel(x_ref, w1_ref, b1_ref, w2_ref, b2_ref, w3_ref, b3_ref, o_ref):
    # One batch tile per grid step; all three matmuls + ReLUs fused.
    # Weights are bf16 (MXU-native); accumulation and epilogue in f32.
    x = x_ref[...].astype(jnp.bfloat16)            # no-op if x already bf16

    h1 = jnp.dot(x, w1_ref[...], preferred_element_type=jnp.float32) + b1_ref[...]
    h1 = jnp.maximum(h1, 0.0).astype(jnp.bfloat16)

    h2 = jnp.dot(h1, w2_ref[...], preferred_element_type=jnp.float32) + b2_ref[...]
    h2 = jnp.maximum(h2, 0.0).astype(jnp.bfloat16)

    h3 = jnp.dot(h2, w3_ref[...], preferred_element_type=jnp.float32) + b3_ref[...]
    # Store only the 100 logical output columns (masked vst, hidden under DMA).
    o_ref[...] = h3[:, :OUT_DIM].astype(o_ref.dtype)


def dnn_forward(x, kernel_params, *, tile_b=2048, out_dtype=jnp.float32):
    """x: (B, 38) float32 or bfloat16 -> (B, 100) out_dtype."""
    w1p, b1p, w2p, b2p, w3p, b3p = kernel_params
    B, F = x.shape

    # Batch tile: capped at tile_b, but keep ~8 grid steps for large batches so
    # the "parallel" axis can shard across v7x's two TensorCores with enough
    # steps per core left for the BlockSpec double-buffering to overlap DMA
    # with compute.  (VMEM at tb=2048 is ~8 MiB -- nowhere near binding.)
    tb = min(tile_b, _round_up(pl.cdiv(B, 8), 8))
    tb = max(tb, 8)
    grid = (pl.cdiv(B, tb),)                       # partial last block allowed

    # Advisory cost estimate (padded FLOPs, logical HBM bytes).
    flops = 2 * B * (IN_DIM * H1_PAD + H1_PAD * H2_PAD + H2_PAD * OUT_PAD)
    weight_bytes = sum(int(p.size) * p.dtype.itemsize for p in kernel_params)
    bytes_accessed = (int(x.size) * x.dtype.itemsize
                      + B * OUT_DIM * jnp.dtype(out_dtype).itemsize
                      + weight_bytes)

    resident = lambda a: pl.BlockSpec(a.shape, lambda i: (0,) * a.ndim)

    out = pl.pallas_call(
        _mlp_kernel,
        out_shape=jax.ShapeDtypeStruct((B, OUT_DIM), out_dtype),
        grid_spec=pltpu.PrefetchScalarGridSpec(
            num_scalar_prefetch=0,
            grid=grid,
            in_specs=[
                pl.BlockSpec((tb, F), lambda i: (i, 0)),   # x: tiled over batch
                resident(w1p), resident(b1p),              # weights/biases stay
                resident(w2p), resident(b2p),              # resident in VMEM
                resident(w3p), resident(b3p),
            ],
            out_specs=pl.BlockSpec((tb, OUT_DIM), lambda i: (i, 0)),
        ),
        compiler_params=pltpu.CompilerParams(
            dimension_semantics=("parallel",),
        ),
        cost_estimate=pl.CostEstimate(
            flops=flops, transcendentals=0, bytes_accessed=bytes_accessed),
    )(x, w1p, b1p, w2p, b2p, w3p, b3p)

    return out


def init_params(key):
    """Deterministic init mimicking nn.Linear's uniform(-1/sqrt(fan_in), ...).

    Returns unpadded f32 params: w (in, out), b (out,).
    """
    def linear(key, fan_in, fan_out):
        kw, kb = jax.random.split(key)
        bound = 1.0 / jnp.sqrt(fan_in)
        w = jax.random.uniform(kw, (fan_in, fan_out), jnp.float32, -bound, bound)
        b = jax.random.uniform(kb, (fan_out,), jnp.float32, -bound, bound)
        return w, b

    k1, k2, k3 = jax.random.split(key, 3)
    w1, b1 = linear(k1, IN_DIM, H1_DIM)
    w2, b2 = linear(k2, H1_DIM, H2_DIM)
    w3, b3 = linear(k3, H2_DIM, OUT_DIM)
    return (w1, b1, w2, b2, w3, b3)


def prepare_params(params):
    """Pad lane dims to 128-multiples; weights -> bf16, biases -> f32 (1, N)."""
    w1, b1, w2, b2, w3, b3 = params

    def pad_w(w, rows, cols):
        out = jnp.zeros((rows, cols), jnp.bfloat16)
        return out.at[: w.shape[0], : w.shape[1]].set(w.astype(jnp.bfloat16))

    def pad_b(b, cols):
        out = jnp.zeros((1, cols), jnp.float32)
        return out.at[0, : b.shape[0]].set(b)

    return (
        pad_w(w1, IN_DIM, H1_PAD), pad_b(b1, H1_PAD),
        pad_w(w2, H1_PAD, H2_PAD), pad_b(b2, H2_PAD),
        pad_w(w3, H2_PAD, OUT_PAD), pad_b(b3, OUT_PAD),
    )


def dnn_reference_f32(x, params):
    """Pure-JAX f32 reference of the PyTorch forward pass."""
    w1, b1, w2, b2, w3, b3 = params
    h = jnp.maximum(x @ w1 + b1, 0.0)
    h = jnp.maximum(h @ w2 + b2, 0.0)
    return h @ w3 + b3


def dnn_reference_bf16(x, params):
    """Reference emulating the kernel's bf16-operand / f32-accumulate math."""
    w1, b1, w2, b2, w3, b3 = params
    bf = jnp.bfloat16
    h = jnp.dot(x.astype(bf), w1.astype(bf), preferred_element_type=jnp.float32) + b1
    h = jnp.maximum(h, 0.0).astype(bf)
    h = jnp.dot(h, w2.astype(bf), preferred_element_type=jnp.float32) + b2
    h = jnp.maximum(h, 0.0).astype(bf)
    return jnp.dot(h, w3.astype(bf), preferred_element_type=jnp.float32) + b3


if __name__ == "__main__":
    key = jax.random.PRNGKey(0)
    k_params, k_x1, k_x2 = jax.random.split(key, 3)

    params = init_params(k_params)
    kernel_params = prepare_params(params)

    # B=8: single exact tile.  B=300: tb=40, 8 grid steps, last block partial
    # (exercises the uneven-grid edge masking with no wrapper padding/slicing).
    for B, kx in ((8, k_x1), (300, k_x2)):
        x = jax.random.normal(kx, (B, IN_DIM), jnp.float32)

        out = jax.block_until_ready(dnn_forward(x, kernel_params))
        assert out.shape == (B, OUT_DIM), out.shape

        ref_bf16 = dnn_reference_bf16(x, params)
        assert jnp.allclose(out, ref_bf16, atol=5e-3, rtol=5e-3), \
            "mismatch vs bf16-emulating reference"

        ref_f32 = dnn_reference_f32(x, params)
        assert jnp.allclose(out, ref_f32, atol=3e-2, rtol=3e-2), \
            "mismatch vs f32 reference"

    print("KERNEL_OK")
</pallas_src>

<mosaic_0001>
module attributes {stable_mosaic.version = 11 : i64} {
  func.func @_mlp_kernel(%arg0: i32, %arg1: memref<8x38xf32, #tpu.memory_space<vmem>>, %arg2: memref<38x128xbf16, #tpu.memory_space<vmem>>, %arg3: memref<1x128xf32, #tpu.memory_space<vmem>>, %arg4: memref<128x256xbf16, #tpu.memory_space<vmem>>, %arg5: memref<1x256xf32, #tpu.memory_space<vmem>>, %arg6: memref<256x128xbf16, #tpu.memory_space<vmem>>, %arg7: memref<1x128xf32, #tpu.memory_space<vmem>>, %arg8: memref<8x100xf32, #tpu.memory_space<vmem>>) attributes {dimension_semantics = [#tpu.dimension_semantics<parallel>], iteration_bounds = array<i64: 1>, scalar_prefetch = 0 : i64, scratch_operands = 0 : i64, tpu.core_type = #tpu.core_type<tc>, window_params = [{transform_indices = @transform_0, window_bounds = array<i64: 8, 38>}, {pipeline_mode = #tpu.pipeline_mode<synchronous>, transform_indices = @transform_1, window_bounds = array<i64: 38, 128>}, {pipeline_mode = #tpu.pipeline_mode<synchronous>, transform_indices = @transform_2, window_bounds = array<i64: 1, 128>}, {pipeline_mode = #tpu.pipeline_mode<synchronous>, transform_indices = @transform_3, window_bounds = array<i64: 128, 256>}, {pipeline_mode = #tpu.pipeline_mode<synchronous>, transform_indices = @transform_4, window_bounds = array<i64: 1, 256>}, {pipeline_mode = #tpu.pipeline_mode<synchronous>, transform_indices = @transform_5, window_bounds = array<i64: 256, 128>}, {pipeline_mode = #tpu.pipeline_mode<synchronous>, transform_indices = @transform_6, window_bounds = array<i64: 1, 128>}, {transform_indices = @transform_7, window_bounds = array<i64: 8, 100>}]} {
    %c0 = arith.constant 0 : index
    %c0_0 = arith.constant 0 : index
    %0 = vector.load %arg1[%c0, %c0_0] : memref<8x38xf32, #tpu.memory_space<vmem>>, vector<8x38xf32>
    %1 = arith.truncf %0 : vector<8x38xf32> to vector<8x38xbf16>
    %c0_1 = arith.constant 0 : index
    %c0_2 = arith.constant 0 : index
    %2 = vector.load %arg2[%c0_1, %c0_2] : memref<38x128xbf16, #tpu.memory_space<vmem>>, vector<38x128xbf16>
    %cst = arith.constant dense<0.000000e+00> : vector<8x128xf32>
    %3 = tpu.matmul %1, %2, %cst {dimension_numbers = #tpu.dot_dimension_numbers<[1], [0], [0], [1], [0, 0, 1, 1], [], []>} : vector<8x38xbf16>, vector<38x128xbf16>, vector<8x128xf32> -> vector<8x128xf32>
    %c0_3 = arith.constant 0 : index
    %c0_4 = arith.constant 0 : index
    %4 = vector.load %arg3[%c0_3, %c0_4] : memref<1x128xf32, #tpu.memory_space<vmem>>, vector<1x128xf32>
    %5 = vector.broadcast %4 : vector<1x128xf32> to vector<8x128xf32>
    %6 = arith.addf %3, %5 : vector<8x128xf32>
    %cst_5 = arith.constant 0.000000e+00 : f32
    %7 = vector.broadcast %cst_5 : f32 to vector<8x128xf32>
    %8 = arith.maximumf %6, %7 : vector<8x128xf32>
    %9 = arith.truncf %8 : vector<8x128xf32> to vector<8x128xbf16>
    %c0_6 = arith.constant 0 : index
    %c0_7 = arith.constant 0 : index
    %10 = vector.load %arg4[%c0_6, %c0_7] : memref<128x256xbf16, #tpu.memory_space<vmem>>, vector<128x256xbf16>
    %cst_8 = arith.constant dense<0.000000e+00> : vector<8x256xf32>
    %11 = tpu.matmul %9, %10, %cst_8 {dimension_numbers = #tpu.dot_dimension_numbers<[1], [0], [0], [1], [0, 0, 1, 1], [], []>} : vector<8x128xbf16>, vector<128x256xbf16>, vector<8x256xf32> -> vector<8x256xf32>
    %c0_9 = arith.constant 0 : index
    %c0_10 = arith.constant 0 : index
    %12 = vector.load %arg5[%c0_9, %c0_10] : memref<1x256xf32, #tpu.memory_space<vmem>>, vector<1x256xf32>
    %13 = vector.broadcast %12 : vector<1x256xf32> to vector<8x256xf32>
    %14 = arith.addf %11, %13 : vector<8x256xf32>
    %cst_11 = arith.constant 0.000000e+00 : f32
    %15 = vector.broadcast %cst_11 : f32 to vector<8x256xf32>
    %16 = arith.maximumf %14, %15 : vector<8x256xf32>
    %17 = arith.truncf %16 : vector<8x256xf32> to vector<8x256xbf16>
    %c0_12 = arith.constant 0 : index
    %c0_13 = arith.constant 0 : index
    %18 = vector.load %arg6[%c0_12, %c0_13] : memref<256x128xbf16, #tpu.memory_space<vmem>>, vector<256x128xbf16>
    %cst_14 = arith.constant dense<0.000000e+00> : vector<8x128xf32>
    %19 = tpu.matmul %17, %18, %cst_14 {dimension_numbers = #tpu.dot_dimension_numbers<[1], [0], [0], [1], [0, 0, 1, 1], [], []>} : vector<8x256xbf16>, vector<256x128xbf16>, vector<8x128xf32> -> vector<8x128xf32>
    %c0_15 = arith.constant 0 : index
    %c0_16 = arith.constant 0 : index
    %20 = vector.load %arg7[%c0_15, %c0_16] : memref<1x128xf32, #tpu.memory_space<vmem>>, vector<1x128xf32>
    %21 = vector.broadcast %20 : vector<1x128xf32> to vector<8x128xf32>
    %22 = arith.addf %19, %21 : vector<8x128xf32>
    %23 = vector.extract_strided_slice %22 {offsets = [0, 0], sizes = [8, 100], strides = [1, 1]} : vector<8x128xf32> to vector<8x100xf32>
    %c0_17 = arith.constant 0 : index
    %c0_18 = arith.constant 0 : index
    %24 = vector.load %arg8[%c0_17, %c0_18] : memref<8x100xf32, #tpu.memory_space<vmem>>, vector<8x100xf32>
    tpu.vector_store %arg8[%c0_17, %c0_18], %23 {strides = array<i32>} : memref<8x100xf32, #tpu.memory_space<vmem>>, vector<8x100xf32>,
    return
  }
  func.func @transform_0(%arg0: i32) -> (i32, i32) {
    %c0_i32 = arith.constant 0 : i32
    %c0_i32_0 = arith.constant 0 : i32
    return %arg0, %c0_i32 : i32, i32
  }
  func.func @transform_1(%arg0: i32) -> (i32, i32) {
    %c0_i32 = arith.constant 0 : i32
    %c0_i32_0 = arith.constant 0 : i32
    %c0_i32_1 = arith.constant 0 : i32
    return %c0_i32, %c0_i32_0 : i32, i32
  }
  func.func @transform_2(%arg0: i32) -> (i32, i32) {
    %c0_i32 = arith.constant 0 : i32
    %c0_i32_0 = arith.constant 0 : i32
    %c0_i32_1 = arith.constant 0 : i32
    return %c0_i32, %c0_i32_0 : i32, i32
  }
  func.func @transform_3(%arg0: i32) -> (i32, i32) {
    %c0_i32 = arith.constant 0 : i32
    %c0_i32_0 = arith.constant 0 : i32
    %c0_i32_1 = arith.constant 0 : i32
    return %c0_i32, %c0_i32_0 : i32, i32
  }
  func.func @transform_4(%arg0: i32) -> (i32, i32) {
    %c0_i32 = arith.constant 0 : i32
    %c0_i32_0 = arith.constant 0 : i32
    %c0_i32_1 = arith.constant 0 : i32
    return %c0_i32, %c0_i32_0 : i32, i32
  }
  func.func @transform_5(%arg0: i32) -> (i32, i32) {
    %c0_i32 = arith.constant 0 : i32
    %c0_i32_0 = arith.constant 0 : i32
    %c0_i32_1 = arith.constant 0 : i32
    return %c0_i32, %c0_i32_0 : i32, i32
  }
  func.func @transform_6(%arg0: i32) -> (i32, i32) {
    %c0_i32 = arith.constant 0 : i32
    %c0_i32_0 = arith.constant 0 : i32
    %c0_i32_1 = arith.constant 0 : i32
    return %c0_i32, %c0_i32_0 : i32, i32
  }
  func.func @transform_7(%arg0: i32) -> (i32, i32) {
    %c0_i32 = arith.constant 0 : i32
    %c0_i32_0 = arith.constant 0 : i32
    return %arg0, %c0_i32 : i32, i32
  }
}

</mosaic_0001>

<llo_original>
// kernel: tpu_custom_call.1
$region0: #{tpu_custom_call.1}
  #allocation0 [shape = 'u32[]', space=smem, size = 0x4, offset = 0x4, fixed_abs, tag = 'smem constant byte address 0x4 - core index']
  #allocation1 [shape = 'u32[144,128]{1,0:T(1,128)}', space=vmem, size = 0x12000, scoped, tag = 'internal scratch']
  %s0 = inlined_call_operand.hbm [shape: f32[8,38], index: 0, kind: input, shape index: {}]
  %s1 = inlined_call_operand.hbm [shape: bf16[38,128], index: 1, kind: input, shape index: {}]
  %s2 = inlined_call_operand.vmem [shape: f32[1,128], index: 2, kind: input, shape index: {}]
  %s3 = inlined_call_operand.hbm [shape: bf16[128,256], index: 3, kind: input, shape index: {}]
  %s4 = inlined_call_operand.vmem [shape: f32[1,256], index: 4, kind: input, shape index: {}]
  %s5 = inlined_call_operand.hbm [shape: bf16[256,128], index: 5, kind: input, shape index: {}]
  %s6 = inlined_call_operand.vmem [shape: f32[1,128], index: 6, kind: input, shape index: {}]
  %s7 = inlined_call_operand.hbm [shape: f32[8,100], index: 7, kind: output, shape index: {}]
  %s8 = sld [smem:[#allocation0]]
  $region54: #{tpu_custom_call.1} parent=0
    _
  %s10 = ssub.s32 1, %s8
  %s11 = scalar_select 0, %s10, %s8
  $region1: #{tpu_custom_call.1} parent=0
    #allocation2 [shape = 'u8[4096]{0}', space=vmem, size = 0x1000, scoped, tag = 'input window, operand 0, single buffered']
    #allocation3 [shape = 's32[1]{0}', space=sflag, size = 0x4, scoped, tag = 'scoped memory for tpu_custom_call.1']
    #allocation4 [shape = 's32[1]{0}', space=sflag, size = 0x4, scoped, tag = 'scoped memory for tpu_custom_call.1']
    #allocation5 [shape = 'u8[10240]{0}', space=vmem, size = 0x2800, scoped, tag = 'input window, operand 1, single buffered']
    #allocation6 [shape = 's32[1]{0}', space=sflag, size = 0x4, scoped, tag = 'scoped memory for tpu_custom_call.1']
    #allocation7 [shape = 'u8[65536]{0}', space=vmem, size = 0x10000, scoped, tag = 'input window, operand 3, single buffered']
    #allocation8 [shape = 'u8[65536]{0}', space=vmem, size = 0x10000, scoped, tag = 'input window, operand 5, single buffered']
    #allocation9 [shape = 's32[1]{0}', space=sflag, size = 0x4, scoped, tag = 'scoped memory for tpu_custom_call.1']
    #allocation10 [shape = 'u8[4096]{0}', space=vmem, size = 0x1000, scoped, tag = 'output window, operand 0, single buffered']
    %12 = vsyncpa [#allocation3], 0
    %13 = vsyncpa [#allocation6], 0
    %14 = vsyncpa [#allocation9], 0
    %15 = vsyncpa [#allocation4], 0
    // Predicated region
    $region2: #{tpu_custom_call.1} parent=1 // pred_check
      _
    $region3: #{tpu_custom_call.1} parent=1 // pred_check_branch
      %17 = sbr.rel (0) target = $region5
    $region4: #{tpu_custom_call.1} parent=1 // pred_region
      %s19 = ssub.s32 128, 128
      %20 = vsyncadd [#allocation3], %s19
      %s22 = sshll.u32 [#allocation2], 4
      %s23 = int_to_ptr.vmem [resolvable:$true] %s22
      %25 = dma.hbm_to_vmem [thread:$0]  %s0, 128, %s23, [#allocation3]
    $region5: #{tpu_custom_call.1} parent=1 // pred_fallthru
      _
    // Predicated region
    $region6: #{tpu_custom_call.1} parent=1 // pred_check
      _
    $region7: #{tpu_custom_call.1} parent=1 // pred_check_branch
      %27 = sbr.rel (0) target = $region9
    $region8: #{tpu_custom_call.1} parent=1 // pred_region
      %s29 = ssub.s32 320, 320
      %30 = vsyncadd [#allocation6], %s29
      %s31 = sshll.u32 [#allocation5], 4
      %s32 = int_to_ptr.vmem [resolvable:$true] %s31
      %37 = dma.hbm_to_vmem [thread:$0]  %s1, 320, %s32, [#allocation6], 64, 64, 4
    $region9: #{tpu_custom_call.1} parent=1 // pred_fallthru
      _
    // Predicated region
    $region10: #{tpu_custom_call.1} parent=1 // pred_check
      _
    $region11: #{tpu_custom_call.1} parent=1 // pred_check_branch
      %39 = sbr.rel (0) target = $region13
    $region12: #{tpu_custom_call.1} parent=1 // pred_region
      _
    $region13: #{tpu_custom_call.1} parent=1 // pred_fallthru
      _
    // Predicated region
    $region14: #{tpu_custom_call.1} parent=1 // pred_check
      _
    $region15: #{tpu_custom_call.1} parent=1 // pred_check_branch
      %41 = sbr.rel (0) target = $region17
    $region16: #{tpu_custom_call.1} parent=1 // pred_region
      %s43 = ssub.s32 2048, 2048
      %44 = vsyncadd [#allocation6], %s43
      %s45 = sshll.u32 [#allocation7], 4
      %s46 = int_to_ptr.vmem [resolvable:$true] %s45
      %51 = dma.hbm_to_vmem [thread:$0]  %s3, 2048, %s46, [#allocation6], 128, 128, 8
    $region17: #{tpu_custom_call.1} parent=1 // pred_fallthru
      _
    // Predicated region
    $region18: #{tpu_custom_call.1} parent=1 // pred_check
      _
    $region19: #{tpu_custom_call.1} parent=1 // pred_check_branch
      %53 = sbr.rel (0) target = $region21
    $region20: #{tpu_custom_call.1} parent=1 // pred_region
      _
    $region21: #{tpu_custom_call.1} parent=1 // pred_fallthru
      _
    // Predicated region
    $region22: #{tpu_custom_call.1} parent=1 // pred_check
      _
    $region23: #{tpu_custom_call.1} parent=1 // pred_check_branch
      %55 = sbr.rel (0) target = $region25
    $region24: #{tpu_custom_call.1} parent=1 // pred_region
      %s57 = ssub.s32 2048, 2048
      %58 = vsyncadd [#allocation9], %s57
      %s59 = sshll.u32 [#allocation8], 4
      %s60 = int_to_ptr.vmem [resolvable:$true] %s59
      %65 = dma.hbm_to_vmem [thread:$0]  %s5, 2048, %s60, [#allocation9], 64, 64, 4
    $region25: #{tpu_custom_call.1} parent=1 // pred_fallthru
      _
    // Predicated region
    $region26: #{tpu_custom_call.1} parent=1 // pred_check
      _
    $region27: #{tpu_custom_call.1} parent=1 // pred_check_branch
      %67 = sbr.rel (0) target = $region29
    $region28: #{tpu_custom_call.1} parent=1 // pred_region
      _
    $region29: #{tpu_custom_call.1} parent=1 // pred_fallthru
      _
    // Predicated region
    $region30: #{tpu_custom_call.1} parent=1 // pred_check
      _
    $region31: #{tpu_custom_call.1} parent=1 // pred_check_branch
      %69 = sbr.rel (0) target = $region33
    $region32: #{tpu_custom_call.1} parent=1 // pred_region
      %70 = dma.done [#allocation3], 128
    $region33: #{tpu_custom_call.1} parent=1 // pred_fallthru
      _
    // Predicated region
    $region34: #{tpu_custom_call.1} parent=1 // pred_check
      _
    $region35: #{tpu_custom_call.1} parent=1 // pred_check_branch
      %72 = sbr.rel (0) target = $region37
    $region36: #{tpu_custom_call.1} parent=1 // pred_region
      %73 = dma.done [#allocation6], 320
    $region37: #{tpu_custom_call.1} parent=1 // pred_fallthru
      _
    // Predicated region
    $region38: #{tpu_custom_call.1} parent=1 // pred_check
      _
    $region39: #{tpu_custom_call.1} parent=1 // pred_check_branch
      %75 = sbr.rel (0) target = $region41
    $region40: #{tpu_custom_call.1} parent=1 // pred_region
      %76 = dma.done [#allocation6], 2048
    $region41: #{tpu_custom_call.1} parent=1 // pred_fallthru
      _
    // Predicated region
    $region42: #{tpu_custom_call.1} parent=1 // pred_check
      _
    $region43: #{tpu_custom_call.1} parent=1 // pred_check_branch
      %78 = sbr.rel (0) target = $region45
    $region44: #{tpu_custom_call.1} parent=1 // pred_region
      %79 = dma.done [#allocation9], 2048
    $region45: #{tpu_custom_call.1} parent=1 // pred_fallthru
      _
    %v81 = vld [vmem:[#allocation2] sm:$0xff]
    %v82 = vpack.c.bf16 %v81, %v81
    %v83 = vld [vmem:[#allocation5] sm:$0xf]
    %v84 = vld [vmem:[#allocation5 + $0x4] sm:$0xf]
    %v85 = vld [vmem:[#allocation5 + $0x8] sm:$0xf]
    %v86 = vld [vmem:[#allocation5 + $0xc] sm:$0xf]
    %v87 = vld [vmem:[#allocation5 + $0x10] sm:$0x7]
    %v88 = vld [vmem:[%s2] sm:$0x1]
    %v90 = vlaneseq
    %v91 = vshrl.u32 %v90, 7
    %v92 = vsub.s32 0, %v91
    %v93 = vrot.slane %v88, %v92
    %v100 = vunpack.c.l.b16 %v83
    %v101 = vunpack.c.l.b16 %v84
    %v102 = vunpack.c.l.b16 %v85
    %v103 = vunpack.c.l.b16 %v86
    %v104 = vunpack.c.l.b16 %v87
    %v105 = vpack.c.b16 %v101, %v100
    %v106 = vpack.c.b16 %v103, %v102
    %v107 = vpack.c.b16 %v104, %v104
    %vm110 = vcmask 310272
    %v112 = vsel %vm110, %v82, 0
    %vm114 = vcmask 1042432
    %v116 = vsel %vm114, %v107, 0
    %118 = vmatprep.subr.bf16.mxu0 0
    %119 = vmatpush1.bf16.msra.mxu0 %v105
    %120 = vmatprep.subr.bf16.mxu0 0
    %121 = vmatpush1.bf16.msra.mxu0 %v106
    %122 = vmatprep.subr.bf16.mxu0 0
    %123 = vmatpush1.bf16.msra.mxu0 %v116
    %124 = vmatprep.subr.bf16.mxu0 0
    %125 = vmatpush1.bf16.msra.mxu0 0
    %126 = vmatprep.subr.bf16.mxu0 0
    %127 = vmatpush1.bf16.msra.mxu0 0
    %128 = vmatprep.subr.bf16.mxu0 0
    %129 = vmatpush1.bf16.msra.mxu0 0
    %130 = vmatprep.subr.bf16.mxu0 0
    %131 = vmatpush1.bf16.msra.mxu0 0
    %132 = vmatprep.subr.bf16.mxu0 0
    %133 = vmatpush1.bf16.msra.mxu0 0
    %134 = vmatprep.subr.bf16.mxu0 0
    %135 = vmatpush1.bf16.msra.mxu0 0
    %136 = vmatprep.subr.bf16.mxu0 0
    %137 = vmatpush1.bf16.msra.mxu0 0
    %138 = vmatprep.subr.bf16.mxu0 0
    %139 = vmatpush1.bf16.msra.mxu0 0
    %140 = vmatprep.subr.bf16.mxu0 0
    %141 = vmatpush1.bf16.msra.mxu0 0
    %142 = vmatprep.subr.bf16.mxu0 0
    %143 = vmatpush1.bf16.msra.mxu0 0
    %144 = vmatprep.subr.bf16.mxu0 0
    %145 = vmatpush1.bf16.msra.mxu0 0
    %146 = vmatprep.subr.bf16.mxu0 0
    %147 = vmatpush1.bf16.msra.mxu0 0
    %148 = vmatprep.subr.bf16.mxu0 0
    %149 = vmatpush1.bf16.msra.mxu0 0
    %150 = vmatprep.mubr.bf16.mxu0 0
    %151 = vmatmul.mubr.bf16.gmra.mrb[0].mxu0 %v112
    %v152 = vpop.f32.mrb[0].mxu0
    %v153 = vadd.f32 %v93, %v152
    %v154 = vpop.f32.mrb[0].mxu0
    %v155 = vpop.f32.mrb[0].mxu0
    %v156 = vpop.f32.mrb[0].mxu0
    %157 = vdwg.mxu0
    %v158 = vmax.f32 %v153, 0.0
    %v159 = vpack.c.bf16 %v158, %v158
    %v160 = vld [vmem:[#allocation7] sm:$0xff]
    %v161 = vld [vmem:[#allocation7 + $0x8] sm:$0xff]
    %v162 = vld [vmem:[#allocation7 + $0x10] sm:$0xff]
    %v163 = vld [vmem:[#allocation7 + $0x18] sm:$0xff]
    %v164 = vld [vmem:[#allocation7 + $0x20] sm:$0xff]
    %v165 = vld [vmem:[#allocation7 + $0x28] sm:$0xff]
    %v166 = vld [vmem:[#allocation7 + $0x30] sm:$0xff]
    %v167 = vld [vmem:[#allocation7 + $0x38] sm:$0xff]
    %v168 = vld [vmem:[#allocation7 + $0x40] sm:$0xff]
    %v169 = vld [vmem:[#allocation7 + $0x48] sm:$0xff]
    %v170 = vld [vmem:[#allocation7 + $0x50] sm:$0xff]
    %v171 = vld [vmem:[#allocation7 + $0x58] sm:$0xff]
    %v172 = vld [vmem:[#allocation7 + $0x60] sm:$0xff]
    %v173 = vld [vmem:[#allocation7 + $0x68] sm:$0xff]
    %v174 = vld [vmem:[#allocation7 + $0x70] sm:$0xff]
    %v175 = vld [vmem:[#allocation7 + $0x78] sm:$0xff]
    %v176 = vld [vmem:[%s4] sm:$0x3]
    %v178 = vlaneseq
    %v179 = vshrl.u32 %v178, 7
    %v180 = vsub.s32 0, %v179
    %v181 = vrot.slane %v176, %v180
    %v182 = vlaneseq
    %v183 = vshrl.u32 %v182, 7
    %v184 = vsub.s32 1, %v183
    %v185 = vrot.slane %v176, %v184
    %v204 = vunpack.c.l.b16 %v160
    %v205 = vunpack.c.h.b16 %v160
    %v206 = vunpack.c.l.b16 %v161
    %v207 = vunpack.c.h.b16 %v161
    %v208 = vunpack.c.l.b16 %v162
    %v209 = vunpack.c.h.b16 %v162
    %v210 = vunpack.c.l.b16 %v163
    %v211 = vunpack.c.h.b16 %v163
    %v212 = vunpack.c.l.b16 %v164
    %v213 = vunpack.c.h.b16 %v164
    %v214 = vunpack.c.l.b16 %v165
    %v215 = vunpack.c.h.b16 %v165
    %v216 = vunpack.c.l.b16 %v166
    %v217 = vunpack.c.h.b16 %v166
    %v218 = vunpack.c.l.b16 %v167
    %v219 = vunpack.c.h.b16 %v167
    %v220 = vunpack.c.l.b16 %v168
    %v221 = vunpack.c.h.b16 %v168
    %v222 = vunpack.c.l.b16 %v169
    %v223 = vunpack.c.h.b16 %v169
    %v224 = vunpack.c.l.b16 %v170
    %v225 = vunpack.c.h.b16 %v170
    %v226 = vunpack.c.l.b16 %v171
    %v227 = vunpack.c.h.b16 %v171
    %v228 = vunpack.c.l.b16 %v172
    %v229 = vunpack.c.h.b16 %v172
    %v230 = vunpack.c.l.b16 %v173
    %v231 = vunpack.c.h.b16 %v173
    %v232 = vunpack.c.l.b16 %v174
    %v233 = vunpack.c.h.b16 %v174
    %v234 = vunpack.c.l.b16 %v175
    %v235 = vunpack.c.h.b16 %v175
    %v236 = vpack.c.b16 %v206, %v204
    %v237 = vpack.c.b16 %v207, %v205
    %v238 = vpack.c.b16 %v210, %v208
    %v239 = vpack.c.b16 %v211, %v209
    %v240 = vpack.c.b16 %v214, %v212
    %v241 = vpack.c.b16 %v215, %v213
    %v242 = vpack.c.b16 %v218, %v216
    %v243 = vpack.c.b16 %v219, %v217
    %v244 = vpack.c.b16 %v222, %v220
    %v245 = vpack.c.b16 %v223, %v221
    %v246 = vpack.c.b16 %v226, %v224
    %v247 = vpack.c.b16 %v227, %v225
    %v248 = vpack.c.b16 %v230, %v228
    %v249 = vpack.c.b16 %v231, %v229
    %v250 = vpack.c.b16 %v234, %v232
    %v251 = vpack.c.b16 %v235, %v233
    %268 = vmatprep.subr.bf16.mxu0 %v237
    %269 = vmatpush1.bf16.msra.mxu0 %v236
    %270 = vmatprep.subr.bf16.mxu0 %v239
    %271 = vmatpush1.bf16.msra.mxu0 %v238
    %272 = vmatprep.subr.bf16.mxu0 %v241
    %273 = vmatpush1.bf16.msra.mxu0 %v240
    %274 = vmatprep.subr.bf16.mxu0 %v243
    %275 = vmatpush1.bf16.msra.mxu0 %v242
    %276 = vmatprep.subr.bf16.mxu0 %v245
    %277 = vmatpush1.bf16.msra.mxu0 %v244
    %278 = vmatprep.subr.bf16.mxu0 %v247
    %279 = vmatpush1.bf16.msra.mxu0 %v246
    %280 = vmatprep.subr.bf16.mxu0 %v249
    %281 = vmatpush1.bf16.msra.mxu0 %v248
    %282 = vmatprep.subr.bf16.mxu0 %v251
    %283 = vmatpush1.bf16.msra.mxu0 %v250
    %284 = vmatprep.subr.bf16.mxu0 0
    %285 = vmatpush1.bf16.msra.mxu0 0
    %286 = vmatprep.subr.bf16.mxu0 0
    %287 = vmatpush1.bf16.msra.mxu0 0
    %288 = vmatprep.subr.bf16.mxu0 0
    %289 = vmatpush1.bf16.msra.mxu0 0
    %290 = vmatprep.subr.bf16.mxu0 0
    %291 = vmatpush1.bf16.msra.mxu0 0
    %292 = vmatprep.subr.bf16.mxu0 0
    %293 = vmatpush1.bf16.msra.mxu0 0
    %294 = vmatprep.subr.bf16.mxu0 0
    %295 = vmatpush1.bf16.msra.mxu0 0
    %296 = vmatprep.subr.bf16.mxu0 0
    %297 = vmatpush1.bf16.msra.mxu0 0
    %298 = vmatprep.subr.bf16.mxu0 0
    %299 = vmatpush1.bf16.msra.mxu0 0
    %300 = vmatprep.mubr.bf16.mxu0 0
    %301 = vmatmul.mubr.bf16.gmra.mrb[0].mxu0 %v159
    %v302 = vpop.f32.mrb[0].mxu0
    %v303 = vadd.f32 %v181, %v302
    %v304 = vpop.f32.mrb[0].mxu0
    %v305 = vadd.f32 %v185, %v304
    %v306 = vpop.f32.mrb[0].mxu0
    %v307 = vpop.f32.mrb[0].mxu0
    %308 = vdwg.mxu0
    %v309 = vmax.f32 %v303, 0.0
    %v310 = vmax.f32 %v305, 0.0
    %v311 = vpack.c.bf16 %v309, %v309
    %v312 = vpack.c.bf16 %v310, %v310
    %v313 = vld [vmem:[#allocation8] sm:$0xf]
    %v314 = vld [vmem:[#allocation8 + $0x4] sm:$0xf]
    %v315 = vld [vmem:[#allocation8 + $0x8] sm:$0xf]
    %v316 = vld [vmem:[#allocation8 + $0xc] sm:$0xf]
    %v317 = vld [vmem:[#allocation8 + $0x10] sm:$0xf]
    %v318 = vld [vmem:[#allocation8 + $0x14] sm:$0xf]
    %v319 = vld [vmem:[#allocation8 + $0x18] sm:$0xf]
    %v320 = vld [vmem:[#allocation8 + $0x1c] sm:$0xf]
    %v321 = vld [vmem:[#allocation8 + $0x20] sm:$0xf]
    %v322 = vld [vmem:[#allocation8 + $0x24] sm:$0xf]
    %v323 = vld [vmem:[#allocation8 + $0x28] sm:$0xf]
    %v324 = vld [vmem:[#allocation8 + $0x2c] sm:$0xf]
    %v325 = vld [vmem:[#allocation8 + $0x30] sm:$0xf]
    %v326 = vld [vmem:[#allocation8 + $0x34] sm:$0xf]
    %v327 = vld [vmem:[#allocation8 + $0x38] sm:$0xf]
    %v328 = vld [vmem:[#allocation8 + $0x3c] sm:$0xf]
    %v329 = vld [vmem:[#allocation8 + $0x40] sm:$0xf]
    %v330 = vld [vmem:[#allocation8 + $0x44] sm:$0xf]
    %v331 = vld [vmem:[#allocation8 + $0x48] sm:$0xf]
    %v332 = vld [vmem:[#allocation8 + $0x4c] sm:$0xf]
    %v333 = vld [vmem:[#allocation8 + $0x50] sm:$0xf]
    %v334 = vld [vmem:[#allocation8 + $0x54] sm:$0xf]
    %v335 = vld [vmem:[#allocation8 + $0x58] sm:$0xf]
    %v336 = vld [vmem:[#allocation8 + $0x5c] sm:$0xf]
    %v337 = vld [vmem:[#allocation8 + $0x60] sm:$0xf]
    %v338 = vld [vmem:[#allocation8 + $0x64] sm:$0xf]
    %v339 = vld [vmem:[#allocation8 + $0x68] sm:$0xf]
    %v340 = vld [vmem:[#allocation8 + $0x6c] sm:$0xf]
    %v341 = vld [vmem:[#allocation8 + $0x70] sm:$0xf]
    %v342 = vld [vmem:[#allocation8 + $0x74] sm:$0xf]
    %v343 = vld [vmem:[#allocation8 + $0x78] sm:$0xf]
    %v344 = vld [vmem:[#allocation8 + $0x7c] sm:$0xf]
    %v345 = vld [vmem:[%s6] sm:$0x1]
    %v347 = vlaneseq
    %v348 = vshrl.u32 %v347, 7
    %v349 = vsub.s32 0, %v348
    %v350 = vrot.slane %v345, %v349
    %v384 = vunpack.c.l.b16 %v313
    %v385 = vunpack.c.l.b16 %v314
    %v386 = vunpack.c.l.b16 %v315
    %v387 = vunpack.c.l.b16 %v316
    %v388 = vunpack.c.l.b16 %v317
    %v389 = vunpack.c.l.b16 %v318
    %v390 = vunpack.c.l.b16 %v319
    %v391 = vunpack.c.l.b16 %v320
    %v392 = vunpack.c.l.b16 %v321
    %v393 = vunpack.c.l.b16 %v322
    %v394 = vunpack.c.l.b16 %v323
    %v395 = vunpack.c.l.b16 %v324
    %v396 = vunpack.c.l.b16 %v325
    %v397 = vunpack.c.l.b16 %v326
    %v398 = vunpack.c.l.b16 %v327
    %v399 = vunpack.c.l.b16 %v328
    %v400 = vunpack.c.l.b16 %v329
    %v401 = vunpack.c.l.b16 %v330
    %v402 = vunpack.c.l.b16 %v331
    %v403 = vunpack.c.l.b16 %v332
    %v404 = vunpack.c.l.b16 %v333
    %v405 = vunpack.c.l.b16 %v334
    %v406 = vunpack.c.l.b16 %v335
    %v407 = vunpack.c.l.b16 %v336
    %v408 = vunpack.c.l.b16 %v337
    %v409 = vunpack.c.l.b16 %v338
    %v410 = vunpack.c.l.b16 %v339
    %v411 = vunpack.c.l.b16 %v340
    %v412 = vunpack.c.l.b16 %v341
    %v413 = vunpack.c.l.b16 %v342
    %v414 = vunpack.c.l.b16 %v343
    %v415 = vunpack.c.l.b16 %v344
    %v416 = vpack.c.b16 %v385, %v384
    %v417 = vpack.c.b16 %v387, %v386
    %v418 = vpack.c.b16 %v389, %v388
    %v419 = vpack.c.b16 %v391, %v390
    %v420 = vpack.c.b16 %v393, %v392
    %v421 = vpack.c.b16 %v395, %v394
    %v422 = vpack.c.b16 %v397, %v396
    %v423 = vpack.c.b16 %v399, %v398
    %v424 = vpack.c.b16 %v401, %v400
    %v425 = vpack.c.b16 %v403, %v402
    %v426 = vpack.c.b16 %v405, %v404
    %v427 = vpack.c.b16 %v407, %v406
    %v428 = vpack.c.b16 %v409, %v408
    %v429 = vpack.c.b16 %v411, %v410
    %v430 = vpack.c.b16 %v413, %v412
    %v431 = vpack.c.b16 %v415, %v414
    %448 = vmatprep.subr.bf16.mxu0 0
    %449 = vmatpush1.bf16.msra.mxu0 %v416
    %450 = vmatprep.subr.bf16.mxu0 0
    %451 = vmatpush1.bf16.msra.mxu0 %v417
    %452 = vmatprep.subr.bf16.mxu0 0
    %453 = vmatpush1.bf16.msra.mxu0 %v418
    %454 = vmatprep.subr.bf16.mxu0 0
    %455 = vmatpush1.bf16.msra.mxu0 %v419
    %456 = vmatprep.subr.bf16.mxu0 0
    %457 = vmatpush1.bf16.msra.mxu0 %v420
    %458 = vmatprep.subr.bf16.mxu0 0
    %459 = vmatpush1.bf16.msra.mxu0 %v421
    %460 = vmatprep.subr.bf16.mxu0 0
    %461 = vmatpush1.bf16.msra.mxu0 %v422
    %462 = vmatprep.subr.bf16.mxu0 0
    %463 = vmatpush1.bf16.msra.mxu0 %v423
    %464 = vmatprep.subr.bf16.mxu0 0
    %465 = vmatpush1.bf16.msra.mxu0 %v424
    %466 = vmatprep.subr.bf16.mxu0 0
    %467 = vmatpush1.bf16.msra.mxu0 %v425
    %468 = vmatprep.subr.bf16.mxu0 0
    %469 = vmatpush1.bf16.msra.mxu0 %v426
    %470 = vmatprep.subr.bf16.mxu0 0
    %471 = vmatpush1.bf16.msra.mxu0 %v427
    %472 = vmatprep.subr.bf16.mxu0 0
    %473 = vmatpush1.bf16.msra.mxu0 %v428
    %474 = vmatprep.subr.bf16.mxu0 0
    %475 = vmatpush1.bf16.msra.mxu0 %v429
    %476 = vmatprep.subr.bf16.mxu0 0
    %477 = vmatpush1.bf16.msra.mxu0 %v430
    %478 = vmatprep.subr.bf16.mxu0 0
    %479 = vmatpush1.bf16.msra.mxu0 %v431
    %480 = vmatprep.mubr.bf16.mxu0 %v312
    %481 = vmatmul.mubr.bf16.gmra.mrb[0].mxu0 %v311
    %v482 = vpop.f32.mrb[0].mxu0
    %v483 = vadd.f32 %v350, %v482
    %v484 = vpop.f32.mrb[0].mxu0
    %v485 = vpop.f32.mrb[0].mxu0
    %v486 = vpop.f32.mrb[0].mxu0
    %487 = vdwg.mxu0
    %vm488 = vcmask 818176
    %489 = vst.msk [vmem:[#allocation10] sm:$0xff] %vm488, %v483
    // Predicated region
    $region46: #{tpu_custom_call.1} parent=1 // pred_check
      _
    $region47: #{tpu_custom_call.1} parent=1 // pred_check_branch
      %491 = sbr.rel (0) target = $region49
    $region48: #{tpu_custom_call.1} parent=1 // pred_region
      %s493 = ssub.s32 128, 128
      %494 = vsyncadd [#allocation4], %s493
      %s496 = sshll.u32 [#allocation10], 4
      %s497 = int_to_ptr.vmem [resolvable:$true] %s496
      %499 = dma.vmem_to_hbm [thread:$0]  %s497, 128, %s7, [#allocation4]
    $region49: #{tpu_custom_call.1} parent=1 // pred_fallthru
      _
    // Predicated region
    $region50: #{tpu_custom_call.1} parent=1 // pred_check
      _
    $region51: #{tpu_custom_call.1} parent=1 // pred_check_branch
      %501 = sbr.rel (0) target = $region53
    $region52: #{tpu_custom_call.1} parent=1 // pred_region
      %502 = dma.done [#allocation4], 128
    $region53: #{tpu_custom_call.1} parent=1 // pred_fallthru
      _
    %503 = vsyncpa [#allocation3], 1
    %504 = vsyncpa [#allocation6], 1
    %505 = vsyncpa [#allocation9], 1
    %506 = vsyncpa [#allocation4], 1

</llo_original>
